<compile_context>
chip_gen: v7x
topology: tpu7x:2x2x1
jax: 0.10.0
libtpu: 0.0.40
codegen_flags: <defaults>
</compile_context>

<pallas_src>
import functools

import jax
import jax.numpy as jnp
from jax.experimental import pallas as pl
from jax.experimental.pallas import tpu as pltpu

LANE = 128      # vreg lane width
SUBLANE = 8     # f32 sublane count


def _round_up(x, m):
    return (x + m - 1) // m * m


def _pad_to(a, shape):
    return jnp.pad(a, [(0, t - s) for s, t in zip(a.shape, shape)])


def _const_spec(shape):
    """VMEM-resident (constant index_map), single-buffered weight BlockSpec."""
    ndim = len(shape)
    index_map = lambda i, _n=ndim: (0,) * _n
    try:
        return pl.BlockSpec(shape, index_map, pipeline_mode=pl.Buffered(1))
    except TypeError:  # older BlockSpec without pipeline_mode kwarg
        return pl.BlockSpec(shape, index_map)


def _critic_mlp_kernel(x_ref, w_in_ref, b_in_ref, w_h_ref, b_h_ref,
                       w_out_ref, b_out_ref, o_ref,
                       *, hdn_layers: int, out_chnls: int):
    """(Linear+ReLU) -> hdn_layers*(Linear+ReLU) -> Linear on one batch tile."""
    # Fused input layer: x = [status | actions] was concatenated in the wrapper.
    acc = jnp.dot(x_ref[...], w_in_ref[...], preferred_element_type=jnp.float32)
    h = jnp.maximum(acc + b_in_ref[...], 0.0).astype(jnp.bfloat16)  # bf16 carry

    # Hidden stack (static unroll is fine at small depth; switch to
    # lax.fori_loop(..., unroll=True) if hdn_layers grows beyond ~4).
    for l in range(hdn_layers):
        acc = jnp.dot(h, w_h_ref[l], preferred_element_type=jnp.float32)
        h = jnp.maximum(acc + b_h_ref[l], 0.0).astype(jnp.bfloat16)

    # Q head (no activation). Lane-dense store: slice the real columns, transpose
    # the small (TB, out_chnls) result to (out_chnls, TB) so every stored byte is
    # a real Q value (HBM writeback is 4 B/row instead of 512 B/row).
    out = jnp.dot(h, w_out_ref[...], preferred_element_type=jnp.float32)
    out_t = out[:, :out_chnls].T                      # (out_chnls, TB), XLU transpose
    o_ref[...] = (out_t + b_out_ref[...]).astype(o_ref.dtype)


def critic_net_forward(status, actions, params):
    """JAX wrapper reproducing CriticNet.forward (bf16 matmuls, f32 accumulation)."""
    if status.ndim == 1:
        status = status[:, None]
    if actions.ndim == 1:
        actions = actions[:, None]
    status = status.astype(jnp.float32)
    actions = actions.astype(jnp.float32)

    w_in, b_in, w_h, b_h, w_out, b_out = params
    B, S = status.shape
    A = actions.shape[1]
    IN = S + A
    hdn_layers = w_h.shape[0]
    out_chnls = w_out.shape[1]

    H = _round_up(w_in.shape[1], LANE)     # lane-aligned hidden width
    O = _round_up(out_chnls, LANE)         # head weight padded for a conventional matmul

    # --- pack weights: zero-pad to aligned shapes, cast matmul inputs to bf16 ---
    w_in_p = _pad_to(w_in, (IN, H)).astype(jnp.bfloat16)
    b_in_p = _pad_to(b_in.reshape(1, -1), (1, H)).astype(jnp.float32)
    w_h_p = _pad_to(w_h, (hdn_layers, H, H)).astype(jnp.bfloat16)
    b_h_p = _pad_to(b_h.reshape(hdn_layers, 1, -1),
                    (hdn_layers, 1, H)).astype(jnp.float32)
    w_out_p = _pad_to(w_out, (H, O)).astype(jnp.bfloat16)
    b_out_p = b_out.reshape(out_chnls, 1).astype(jnp.float32)   # added post-transpose

    # --- batch tiling: balanced tiles; >=2 tiles for large batches (v7x megacore).
    # When tiled (nt > 1) TB must be a multiple of 128 so the transposed
    # (out_chnls, TB) output blocks satisfy the lane-divisibility rule.
    B8 = _round_up(max(B, 1), SUBLANE)
    if B8 <= 2 * LANE:                       # small batch: single full-dim tile
        nt, TB = 1, B8
    else:
        nt = max(2, pl.cdiv(B8, 512))
        TB = _round_up(pl.cdiv(B8, nt), LANE)
        nt = pl.cdiv(B8, TB)
    B_pad = nt * TB

    # First layer is fused: concat replaces the split matmul (same math as
    # concat([status, actions]) @ W); wrapper already makes new arrays for pad/cast.
    x = jnp.concatenate([status, actions], axis=1)
    if B_pad != B:
        x = jnp.pad(x, ((0, B_pad - B), (0, 0)))
    x = x.astype(jnp.bfloat16)

    # --- VMEM budget: single-buffered weights + double-buffered x/q tiles + live acts.
    try:
        info = pltpu.get_tpu_info()
        phys_vmem = getattr(info, "vmem_capacity_bytes", None) or (64 << 20)
    except Exception:
        phys_vmem = 64 << 20                 # unknown chip: assume smallest (v7x)
    vmem_cap = int(phys_vmem) * 3 // 4       # ~48 MiB on v7x, ~96 MiB on v5e/v6e
    weight_bytes = ((w_in_p.size + w_h_p.size + w_out_p.size) * 2
                    + (b_in_p.size + b_h_p.size + b_out_p.size) * 4)
    stream_bytes = 2 * (TB * IN * 2 + out_chnls * TB * 4)
    live_bytes = TB * H * 8 + TB * O * 4
    vmem_limit = int(min(max(2 * (weight_bytes + stream_bytes + live_bytes),
                             32 << 20), vmem_cap))

    kernel = functools.partial(_critic_mlp_kernel,
                               hdn_layers=hdn_layers, out_chnls=out_chnls)

    out_pad = pl.pallas_call(
        kernel,
        out_shape=jax.ShapeDtypeStruct((out_chnls, B_pad), jnp.float32),
        grid=(nt,),
        in_specs=[
            pl.BlockSpec((TB, IN), lambda i: (i, 0)),        # [status|actions] tile
            _const_spec((IN, H)),
            _const_spec((1, H)),
            _const_spec((hdn_layers, H, H)),
            _const_spec((hdn_layers, 1, H)),
            _const_spec((H, O)),
            _const_spec((out_chnls, 1)),
        ],
        out_specs=pl.BlockSpec((out_chnls, TB), lambda i: (0, i)),
        compiler_params=pltpu.CompilerParams(
            dimension_semantics=("parallel",),               # megacore split on v7x
            vmem_limit_bytes=vmem_limit),
    )(x, w_in_p, b_in_p, w_h_p, b_h_p, w_out_p, b_out_p)

    return out_pad[:, :B].T                                   # (B, out_chnls)


def init_critic_params(key, state_size, action_size, hdn_chnls, hdn_layers, out_chnls):
    """Deterministic init mimicking PyTorch Linear default (uniform(-1/sqrt(fan_in), .)).

    Weights are stored as (in_features, out_features) == W.T of the PyTorch layer.
    """
    in_chnls = state_size + action_size
    keys = jax.random.split(key, 6)

    def unif(k, shape, fan_in):
        bound = 1.0 / jnp.sqrt(jnp.float32(fan_in))
        return jax.random.uniform(k, shape, jnp.float32, -bound, bound)

    w_in = unif(keys[0], (in_chnls, hdn_chnls), in_chnls)
    b_in = unif(keys[1], (hdn_chnls,), in_chnls)
    w_h = unif(keys[2], (hdn_layers, hdn_chnls, hdn_chnls), hdn_chnls)
    b_h = unif(keys[3], (hdn_layers, hdn_chnls), hdn_chnls)
    w_out = unif(keys[4], (hdn_chnls, out_chnls), hdn_chnls)
    b_out = unif(keys[5], (out_chnls,), hdn_chnls)
    return (w_in, b_in, w_h, b_h, w_out, b_out)


def _reference_forward(status, actions, params):
    """Pure-JAX reference matching the kernel numerics (bf16 matmul inputs, f32 acc)."""
    if status.ndim == 1:
        status = status[:, None]
    if actions.ndim == 1:
        actions = actions[:, None]
    w_in, b_in, w_h, b_h, w_out, b_out = params
    x = jnp.concatenate([status.astype(jnp.float32),
                         actions.astype(jnp.float32)], axis=1).astype(jnp.bfloat16)
    h = jnp.dot(x, w_in.astype(jnp.bfloat16), preferred_element_type=jnp.float32)
    h = jnp.maximum(h + b_in[None, :], 0.0)
    for l in range(w_h.shape[0]):
        h = jnp.dot(h.astype(jnp.bfloat16), w_h[l].astype(jnp.bfloat16),
                    preferred_element_type=jnp.float32)
        h = jnp.maximum(h + b_h[l][None, :], 0.0)
    out = jnp.dot(h.astype(jnp.bfloat16), w_out.astype(jnp.bfloat16),
                  preferred_element_type=jnp.float32)
    return out + b_out[None, :]


if __name__ == "__main__":
    # Small shapes consistent with the module's forward.
    state_size = 8
    action_size = 4
    hdn_chnls = 32
    hdn_layers = 2
    out_chnls = 1
    batch = 2

    key = jax.random.PRNGKey(0)
    k_s, k_a, k_p = jax.random.split(key, 3)

    status = jax.random.normal(k_s, (batch, state_size), jnp.float32)
    actions = jax.random.normal(k_a, (batch, action_size), jnp.float32)
    params = init_critic_params(k_p, state_size, action_size,
                                hdn_chnls, hdn_layers, out_chnls)

    q = critic_net_forward(status, actions, params)
    q = jax.block_until_ready(q)

    q_ref = _reference_forward(status, actions, params)
    assert q.shape == (batch, out_chnls)
    assert jnp.allclose(q, q_ref, atol=2e-2, rtol=2e-2), \
        f"mismatch vs reference: {q} vs {q_ref}"

    print("KERNEL_OK")
</pallas_src>

<mosaic_0001>
module attributes {stable_mosaic.version = 11 : i64} {
  func.func @_critic_mlp_kernel(%arg0: i32, %arg1: memref<8x12xbf16, #tpu.memory_space<vmem>>, %arg2: memref<12x128xbf16, #tpu.memory_space<vmem>>, %arg3: memref<1x128xf32, #tpu.memory_space<vmem>>, %arg4: memref<2x128x128xbf16, #tpu.memory_space<vmem>>, %arg5: memref<2x1x128xf32, #tpu.memory_space<vmem>>, %arg6: memref<128x128xbf16, #tpu.memory_space<vmem>>, %arg7: memref<1x1xf32, #tpu.memory_space<vmem>>, %arg8: memref<1x8xf32, #tpu.memory_space<vmem>>) attributes {dimension_semantics = [#tpu.dimension_semantics<parallel>], iteration_bounds = array<i64: 1>, scalar_prefetch = 0 : i64, scratch_operands = 0 : i64, tpu.core_type = #tpu.core_type<tc>, window_params = [{transform_indices = @transform_0, window_bounds = array<i64: 8, 12>}, {pipeline_mode = #tpu.pipeline_mode<synchronous>, transform_indices = @transform_1, window_bounds = array<i64: 12, 128>}, {pipeline_mode = #tpu.pipeline_mode<synchronous>, transform_indices = @transform_2, window_bounds = array<i64: 1, 128>}, {pipeline_mode = #tpu.pipeline_mode<synchronous>, transform_indices = @transform_3, window_bounds = array<i64: 2, 128, 128>}, {pipeline_mode = #tpu.pipeline_mode<synchronous>, transform_indices = @transform_4, window_bounds = array<i64: 2, 1, 128>}, {pipeline_mode = #tpu.pipeline_mode<synchronous>, transform_indices = @transform_5, window_bounds = array<i64: 128, 128>}, {pipeline_mode = #tpu.pipeline_mode<synchronous>, transform_indices = @transform_6, window_bounds = array<i64: 1, 1>}, {transform_indices = @transform_7, window_bounds = array<i64: 1, 8>}]} {
    %c0 = arith.constant 0 : index
    %c0_0 = arith.constant 0 : index
    %0 = vector.load %arg1[%c0, %c0_0] : memref<8x12xbf16, #tpu.memory_space<vmem>>, vector<8x12xbf16>
    %c0_1 = arith.constant 0 : index
    %c0_2 = arith.constant 0 : index
    %1 = vector.load %arg2[%c0_1, %c0_2] : memref<12x128xbf16, #tpu.memory_space<vmem>>, vector<12x128xbf16>
    %cst = arith.constant dense<0.000000e+00> : vector<8x128xf32>
    %2 = tpu.matmul %0, %1, %cst {dimension_numbers = #tpu.dot_dimension_numbers<[1], [0], [0], [1], [0, 0, 1, 1], [], []>} : vector<8x12xbf16>, vector<12x128xbf16>, vector<8x128xf32> -> vector<8x128xf32>
    %c0_3 = arith.constant 0 : index
    %c0_4 = arith.constant 0 : index
    %3 = vector.load %arg3[%c0_3, %c0_4] : memref<1x128xf32, #tpu.memory_space<vmem>>, vector<1x128xf32>
    %4 = vector.broadcast %3 : vector<1x128xf32> to vector<8x128xf32>
    %5 = arith.addf %2, %4 : vector<8x128xf32>
    %cst_5 = arith.constant 0.000000e+00 : f32
    %6 = vector.broadcast %cst_5 : f32 to vector<8x128xf32>
    %7 = arith.maximumf %5, %6 : vector<8x128xf32>
    %8 = arith.truncf %7 : vector<8x128xf32> to vector<8x128xbf16>
    %c0_6 = arith.constant 0 : index
    %c0_7 = arith.constant 0 : index
    %c0_8 = arith.constant 0 : index
    %9 = vector.load %arg4[%c0_6, %c0_7, %c0_8] : memref<2x128x128xbf16, #tpu.memory_space<vmem>>, vector<1x128x128xbf16>
    %10 = vector.shape_cast %9 : vector<1x128x128xbf16> to vector<128x128xbf16>
    %cst_9 = arith.constant dense<0.000000e+00> : vector<8x128xf32>
    %11 = tpu.matmul %8, %10, %cst_9 {dimension_numbers = #tpu.dot_dimension_numbers<[1], [0], [0], [1], [0, 0, 1, 1], [], []>} : vector<8x128xbf16>, vector<128x128xbf16>, vector<8x128xf32> -> vector<8x128xf32>
    %c0_10 = arith.constant 0 : index
    %c0_11 = arith.constant 0 : index
    %c0_12 = arith.constant 0 : index
    %12 = vector.load %arg5[%c0_10, %c0_11, %c0_12] : memref<2x1x128xf32, #tpu.memory_space<vmem>>, vector<1x1x128xf32>
    %13 = vector.shape_cast %12 : vector<1x1x128xf32> to vector<1x128xf32>
    %14 = vector.broadcast %13 : vector<1x128xf32> to vector<8x128xf32>
    %15 = arith.addf %11, %14 : vector<8x128xf32>
    %cst_13 = arith.constant 0.000000e+00 : f32
    %16 = vector.broadcast %cst_13 : f32 to vector<8x128xf32>
    %17 = arith.maximumf %15, %16 : vector<8x128xf32>
    %18 = arith.truncf %17 : vector<8x128xf32> to vector<8x128xbf16>
    %c1 = arith.constant 1 : index
    %c0_14 = arith.constant 0 : index
    %c0_15 = arith.constant 0 : index
    %19 = vector.load %arg4[%c1, %c0_14, %c0_15] : memref<2x128x128xbf16, #tpu.memory_space<vmem>>, vector<1x128x128xbf16>
    %20 = vector.shape_cast %19 : vector<1x128x128xbf16> to vector<128x128xbf16>
    %cst_16 = arith.constant dense<0.000000e+00> : vector<8x128xf32>
    %21 = tpu.matmul %18, %20, %cst_16 {dimension_numbers = #tpu.dot_dimension_numbers<[1], [0], [0], [1], [0, 0, 1, 1], [], []>} : vector<8x128xbf16>, vector<128x128xbf16>, vector<8x128xf32> -> vector<8x128xf32>
    %c1_17 = arith.constant 1 : index
    %c0_18 = arith.constant 0 : index
    %c0_19 = arith.constant 0 : index
    %22 = vector.load %arg5[%c1_17, %c0_18, %c0_19] : memref<2x1x128xf32, #tpu.memory_space<vmem>>, vector<1x1x128xf32>
    %23 = vector.shape_cast %22 : vector<1x1x128xf32> to vector<1x128xf32>
    %24 = vector.broadcast %23 : vector<1x128xf32> to vector<8x128xf32>
    %25 = arith.addf %21, %24 : vector<8x128xf32>
    %cst_20 = arith.constant 0.000000e+00 : f32
    %26 = vector.broadcast %cst_20 : f32 to vector<8x128xf32>
    %27 = arith.maximumf %25, %26 : vector<8x128xf32>
    %28 = arith.truncf %27 : vector<8x128xf32> to vector<8x128xbf16>
    %c0_21 = arith.constant 0 : index
    %c0_22 = arith.constant 0 : index
    %29 = vector.load %arg6[%c0_21, %c0_22] : memref<128x128xbf16, #tpu.memory_space<vmem>>, vector<128x128xbf16>
    %cst_23 = arith.constant dense<0.000000e+00> : vector<8x128xf32>
    %30 = tpu.matmul %28, %29, %cst_23 {dimension_numbers = #tpu.dot_dimension_numbers<[1], [0], [0], [1], [0, 0, 1, 1], [], []>} : vector<8x128xbf16>, vector<128x128xbf16>, vector<8x128xf32> -> vector<8x128xf32>
    %31 = vector.extract_strided_slice %30 {offsets = [0, 0], sizes = [8, 1], strides = [1, 1]} : vector<8x128xf32> to vector<8x1xf32>
    %32 = tpu.transpose %31, [1, 0] : vector<8x1xf32> -> vector<1x8xf32>
    %c0_24 = arith.constant 0 : index
    %c0_25 = arith.constant 0 : index
    %33 = vector.load %arg7[%c0_24, %c0_25] : memref<1x1xf32, #tpu.memory_space<vmem>>, vector<1x1xf32>
    %34 = vector.broadcast %33 : vector<1x1xf32> to vector<1x8xf32>
    %35 = arith.addf %32, %34 : vector<1x8xf32>
    %c0_26 = arith.constant 0 : index
    %c0_27 = arith.constant 0 : index
    %36 = vector.load %arg8[%c0_26, %c0_27] : memref<1x8xf32, #tpu.memory_space<vmem>>, vector<1x8xf32>
    tpu.vector_store %arg8[%c0_26, %c0_27], %35 {strides = array<i32>} : memref<1x8xf32, #tpu.memory_space<vmem>>, vector<1x8xf32>,
    return
  }
  func.func @transform_0(%arg0: i32) -> (i32, i32) {
    %c0_i32 = arith.constant 0 : i32
    %c0_i32_0 = arith.constant 0 : i32
    return %arg0, %c0_i32 : i32, i32
  }
  func.func @transform_1(%arg0: i32) -> (i32, i32) {
    %c0_i32 = arith.constant 0 : i32
    %c0_i32_0 = arith.constant 0 : i32
    %c0_i32_1 = arith.constant 0 : i32
    return %c0_i32, %c0_i32_0 : i32, i32
  }
  func.func @transform_2(%arg0: i32) -> (i32, i32) {
    %c0_i32 = arith.constant 0 : i32
    %c0_i32_0 = arith.constant 0 : i32
    %c0_i32_1 = arith.constant 0 : i32
    return %c0_i32, %c0_i32_0 : i32, i32
  }
  func.func @transform_3(%arg0: i32) -> (i32, i32, i32) {
    %c0_i32 = arith.constant 0 : i32
    %c0_i32_0 = arith.constant 0 : i32
    %c0_i32_1 = arith.constant 0 : i32
    %c0_i32_2 = arith.constant 0 : i32
    return %c0_i32, %c0_i32_0, %c0_i32_1 : i32, i32, i32
  }
  func.func @transform_4(%arg0: i32) -> (i32, i32, i32) {
    %c0_i32 = arith.constant 0 : i32
    %c0_i32_0 = arith.constant 0 : i32
    %c0_i32_1 = arith.constant 0 : i32
    %c0_i32_2 = arith.constant 0 : i32
    return %c0_i32, %c0_i32_0, %c0_i32_1 : i32, i32, i32
  }
  func.func @transform_5(%arg0: i32) -> (i32, i32) {
    %c0_i32 = arith.constant 0 : i32
    %c0_i32_0 = arith.constant 0 : i32
    %c0_i32_1 = arith.constant 0 : i32
    return %c0_i32, %c0_i32_0 : i32, i32
  }
  func.func @transform_6(%arg0: i32) -> (i32, i32) {
    %c0_i32 = arith.constant 0 : i32
    %c0_i32_0 = arith.constant 0 : i32
    %c0_i32_1 = arith.constant 0 : i32
    return %c0_i32, %c0_i32_0 : i32, i32
  }
  func.func @transform_7(%arg0: i32) -> (i32, i32) {
    %c0_i32 = arith.constant 0 : i32
    %c0_i32_0 = arith.constant 0 : i32
    return %c0_i32, %arg0 : i32, i32
  }
}

</mosaic_0001>

<llo_original>
// kernel: tpu_custom_call.1
$region0: #{tpu_custom_call.1}
  #allocation0 [shape = 'u32[]', space=smem, size = 0x4, offset = 0x4, fixed_abs, tag = 'smem constant byte address 0x4 - core index']
  #allocation1 [shape = 'u32[144,128]{1,0:T(1,128)}', space=vmem, size = 0x12000, scoped, tag = 'internal scratch']
  #allocation2 [shape = 'f32[1,1]{1,0:T(1,128)S(1)}', space=vmem, size = 0x200, scoped, tag = 'scoped memory for tpu_custom_call.1']
  %s0 = inlined_call_operand.hbm [shape: bf16[8,12], index: 0, kind: input, shape index: {}]
  %s1 = inlined_call_operand.hbm [shape: bf16[12,128], index: 1, kind: input, shape index: {}]
  %s2 = inlined_call_operand.vmem [shape: f32[1,128], index: 2, kind: input, shape index: {}]
  %s3 = inlined_call_operand.hbm [shape: bf16[2,128,128], index: 3, kind: input, shape index: {}]
  %s4 = inlined_call_operand.vmem [shape: f32[2,1,128], index: 4, kind: input, shape index: {}]
  %s5 = inlined_call_operand.hbm [shape: bf16[128,128], index: 5, kind: input, shape index: {}]
  %s6 = inlined_call_operand.<no memory space> [shape: f32[1,1], index: 6, kind: input, shape index: {}]
  %s7 = inlined_call_operand.hbm [shape: f32[1,8], index: 7, kind: output, shape index: {}]
  %s8 = sld [smem:[#allocation0]]
  $region54: #{tpu_custom_call.1} parent=0
    _
  %s10 = ssub.s32 1, %s8
  %s11 = scalar_select 0, %s10, %s8
  %v12 = vstv %s6
  %13 = vst [vmem:[#allocation2] sm:$0x1] %v12
  $region1: #{tpu_custom_call.1} parent=0
    #allocation3 [shape = 'u8[2048]{0}', space=vmem, size = 0x800, scoped, tag = 'input window, operand 0, single buffered']
    #allocation4 [shape = 's32[1]{0}', space=sflag, size = 0x4, scoped, tag = 'scoped memory for tpu_custom_call.1']
    #allocation5 [shape = 's32[1]{0}', space=sflag, size = 0x4, scoped, tag = 'scoped memory for tpu_custom_call.1']
    #allocation6 [shape = 'u8[4096]{0}', space=vmem, size = 0x1000, scoped, tag = 'input window, operand 1, single buffered']
    #allocation7 [shape = 's32[1]{0}', space=sflag, size = 0x4, scoped, tag = 'scoped memory for tpu_custom_call.1']
    #allocation8 [shape = 'u8[65536]{0}', space=vmem, size = 0x10000, scoped, tag = 'input window, operand 3, single buffered']
    #allocation9 [shape = 'u8[32768]{0}', space=vmem, size = 0x8000, scoped, tag = 'input window, operand 5, single buffered']
    #allocation10 [shape = 's32[1]{0}', space=sflag, size = 0x4, scoped, tag = 'scoped memory for tpu_custom_call.1']
    #allocation11 [shape = 'u8[512]{0}', space=vmem, size = 0x400, scoped, tag = 'output window, operand 0, single buffered']
    %14 = vsyncpa [#allocation4], 0
    %15 = vsyncpa [#allocation7], 0
    %16 = vsyncpa [#allocation10], 0
    %17 = vsyncpa [#allocation5], 0
    // Predicated region
    $region2: #{tpu_custom_call.1} parent=1 // pred_check
      _
    $region3: #{tpu_custom_call.1} parent=1 // pred_check_branch
      %19 = sbr.rel (0) target = $region5
    $region4: #{tpu_custom_call.1} parent=1 // pred_region
      %s21 = ssub.s32 64, 64
      %22 = vsyncadd [#allocation4], %s21
      %s24 = sshll.u32 [#allocation3], 4
      %s25 = int_to_ptr.vmem [resolvable:$true] %s24
      %27 = dma.hbm_to_vmem [thread:$0]  %s0, 64, %s25, [#allocation4]
    $region5: #{tpu_custom_call.1} parent=1 // pred_fallthru
      _
    // Predicated region
    $region6: #{tpu_custom_call.1} parent=1 // pred_check
      _
    $region7: #{tpu_custom_call.1} parent=1 // pred_check_branch
      %29 = sbr.rel (0) target = $region9
    $region8: #{tpu_custom_call.1} parent=1 // pred_region
      %s31 = ssub.s32 128, 128
      %32 = vsyncadd [#allocation7], %s31
      %s33 = sshll.u32 [#allocation6], 4
      %s34 = int_to_ptr.vmem [resolvable:$true] %s33
      %39 = dma.hbm_to_vmem [thread:$0]  %s1, 128, %s34, [#allocation7], 64, 64, 4
    $region9: #{tpu_custom_call.1} parent=1 // pred_fallthru
      _
    // Predicated region
    $region10: #{tpu_custom_call.1} parent=1 // pred_check
      _
    $region11: #{tpu_custom_call.1} parent=1 // pred_check_branch
      %41 = sbr.rel (0) target = $region13
    $region12: #{tpu_custom_call.1} parent=1 // pred_region
      _
    $region13: #{tpu_custom_call.1} parent=1 // pred_fallthru
      _
    // Predicated region
    $region14: #{tpu_custom_call.1} parent=1 // pred_check
      _
    $region15: #{tpu_custom_call.1} parent=1 // pred_check_branch
      %43 = sbr.rel (0) target = $region17
    $region16: #{tpu_custom_call.1} parent=1 // pred_region
      %s45 = ssub.s32 2048, 2048
      %46 = vsyncadd [#allocation7], %s45
      %s47 = sshll.u32 [#allocation8], 4
      %s48 = int_to_ptr.vmem [resolvable:$true] %s47
      %53 = dma.hbm_to_vmem [thread:$0]  %s3, 2048, %s48, [#allocation7], 64, 64, 4
    $region17: #{tpu_custom_call.1} parent=1 // pred_fallthru
      _
    // Predicated region
    $region18: #{tpu_custom_call.1} parent=1 // pred_check
      _
    $region19: #{tpu_custom_call.1} parent=1 // pred_check_branch
      %55 = sbr.rel (0) target = $region21
    $region20: #{tpu_custom_call.1} parent=1 // pred_region
      _
    $region21: #{tpu_custom_call.1} parent=1 // pred_fallthru
      _
    // Predicated region
    $region22: #{tpu_custom_call.1} parent=1 // pred_check
      _
    $region23: #{tpu_custom_call.1} parent=1 // pred_check_branch
      %57 = sbr.rel (0) target = $region25
    $region24: #{tpu_custom_call.1} parent=1 // pred_region
      %s59 = ssub.s32 1024, 1024
      %60 = vsyncadd [#allocation10], %s59
      %s61 = sshll.u32 [#allocation9], 4
      %s62 = int_to_ptr.vmem [resolvable:$true] %s61
      %67 = dma.hbm_to_vmem [thread:$0]  %s5, 1024, %s62, [#allocation10], 64, 64, 4
    $region25: #{tpu_custom_call.1} parent=1 // pred_fallthru
      _
    // Predicated region
    $region26: #{tpu_custom_call.1} parent=1 // pred_check
      _
    $region27: #{tpu_custom_call.1} parent=1 // pred_check_branch
      %69 = sbr.rel (0) target = $region29
    $region28: #{tpu_custom_call.1} parent=1 // pred_region
      _
    $region29: #{tpu_custom_call.1} parent=1 // pred_fallthru
      _
    // Predicated region
    $region30: #{tpu_custom_call.1} parent=1 // pred_check
      _
    $region31: #{tpu_custom_call.1} parent=1 // pred_check_branch
      %71 = sbr.rel (0) target = $region33
    $region32: #{tpu_custom_call.1} parent=1 // pred_region
      %72 = dma.done [#allocation4], 64
    $region33: #{tpu_custom_call.1} parent=1 // pred_fallthru
      _
    // Predicated region
    $region34: #{tpu_custom_call.1} parent=1 // pred_check
      _
    $region35: #{tpu_custom_call.1} parent=1 // pred_check_branch
      %74 = sbr.rel (0) target = $region37
    $region36: #{tpu_custom_call.1} parent=1 // pred_region
      %75 = dma.done [#allocation7], 128
    $region37: #{tpu_custom_call.1} parent=1 // pred_fallthru
      _
    // Predicated region
    $region38: #{tpu_custom_call.1} parent=1 // pred_check
      _
    $region39: #{tpu_custom_call.1} parent=1 // pred_check_branch
      %77 = sbr.rel (0) target = $region41
    $region40: #{tpu_custom_call.1} parent=1 // pred_region
      %78 = dma.done [#allocation7], 2048
    $region41: #{tpu_custom_call.1} parent=1 // pred_fallthru
      _
    // Predicated region
    $region42: #{tpu_custom_call.1} parent=1 // pred_check
      _
    $region43: #{tpu_custom_call.1} parent=1 // pred_check_branch
      %80 = sbr.rel (0) target = $region45
    $region44: #{tpu_custom_call.1} parent=1 // pred_region
      %81 = dma.done [#allocation10], 1024
    $region45: #{tpu_custom_call.1} parent=1 // pred_fallthru
      _
    %v83 = vld [vmem:[#allocation3] sm:$0xf]
    %v84 = vld [vmem:[#allocation6] sm:$0xf]
    %v85 = vld [vmem:[#allocation6 + $0x4] sm:$0x3]
    %v86 = vld [vmem:[%s2] sm:$0x1]
    %v88 = vlaneseq
    %v89 = vshrl.u32 %v88, 7
    %v90 = vsub.s32 0, %v89
    %v91 = vrot.slane %v86, %v90
    %v95 = vunpack.c.l.b16 %v84
    %v96 = vunpack.c.l.b16 %v85
    %v97 = vpack.c.b16 %v96, %v95
    %vm98 = vcmask 97280
    %v100 = vsel %vm98, %v83, 0
    %vm102 = vcmask 1045504
    %v104 = vsel %vm102, %v97, 0
    %106 = vmatprep.subr.bf16.mxu0 0
    %107 = vmatpush1.bf16.msra.mxu0 %v104
    %108 = vmatprep.subr.bf16.mxu0 0
    %109 = vmatpush1.bf16.msra.mxu0 0
    %110 = vmatprep.subr.bf16.mxu0 0
    %111 = vmatpush1.bf16.msra.mxu0 0
    %112 = vmatprep.subr.bf16.mxu0 0
    %113 = vmatpush1.bf16.msra.mxu0 0
    %114 = vmatprep.subr.bf16.mxu0 0
    %115 = vmatpush1.bf16.msra.mxu0 0
    %116 = vmatprep.subr.bf16.mxu0 0
    %117 = vmatpush1.bf16.msra.mxu0 0
    %118 = vmatprep.subr.bf16.mxu0 0
    %119 = vmatpush1.bf16.msra.mxu0 0
    %120 = vmatprep.subr.bf16.mxu0 0
    %121 = vmatpush1.bf16.msra.mxu0 0
    %122 = vmatprep.subr.bf16.mxu0 0
    %123 = vmatpush1.bf16.msra.mxu0 0
    %124 = vmatprep.subr.bf16.mxu0 0
    %125 = vmatpush1.bf16.msra.mxu0 0
    %126 = vmatprep.subr.bf16.mxu0 0
    %127 = vmatpush1.bf16.msra.mxu0 0
    %128 = vmatprep.subr.bf16.mxu0 0
    %129 = vmatpush1.bf16.msra.mxu0 0
    %130 = vmatprep.subr.bf16.mxu0 0
    %131 = vmatpush1.bf16.msra.mxu0 0
    %132 = vmatprep.subr.bf16.mxu0 0
    %133 = vmatpush1.bf16.msra.mxu0 0
    %134 = vmatprep.subr.bf16.mxu0 0
    %135 = vmatpush1.bf16.msra.mxu0 0
    %136 = vmatprep.subr.bf16.mxu0 0
    %137 = vmatpush1.bf16.msra.mxu0 0
    %138 = vmatprep.mubr.bf16.mxu0 0
    %139 = vmatmul.mubr.bf16.gmra.mrb[0].mxu0 %v100
    %v140 = vpop.f32.mrb[0].mxu0
    %v141 = vadd.f32 %v91, %v140
    %v142 = vpop.f32.mrb[0].mxu0
    %v143 = vpop.f32.mrb[0].mxu0
    %v144 = vpop.f32.mrb[0].mxu0
    %145 = vdwg.mxu0
    %v146 = vmax.f32 %v141, 0.0
    %v147 = vpack.c.bf16 %v146, %v146
    %v148 = vld [vmem:[#allocation8] sm:$0xf]
    %v149 = vld [vmem:[#allocation8 + $0x4] sm:$0xf]
    %v150 = vld [vmem:[#allocation8 + $0x8] sm:$0xf]
    %v151 = vld [vmem:[#allocation8 + $0xc] sm:$0xf]
    %v152 = vld [vmem:[#allocation8 + $0x10] sm:$0xf]
    %v153 = vld [vmem:[#allocation8 + $0x14] sm:$0xf]
    %v154 = vld [vmem:[#allocation8 + $0x18] sm:$0xf]
    %v155 = vld [vmem:[#allocation8 + $0x1c] sm:$0xf]
    %v156 = vld [vmem:[#allocation8 + $0x20] sm:$0xf]
    %v157 = vld [vmem:[#allocation8 + $0x24] sm:$0xf]
    %v158 = vld [vmem:[#allocation8 + $0x28] sm:$0xf]
    %v159 = vld [vmem:[#allocation8 + $0x2c] sm:$0xf]
    %v160 = vld [vmem:[#allocation8 + $0x30] sm:$0xf]
    %v161 = vld [vmem:[#allocation8 + $0x34] sm:$0xf]
    %v162 = vld [vmem:[#allocation8 + $0x38] sm:$0xf]
    %v163 = vld [vmem:[#allocation8 + $0x3c] sm:$0xf]
    %v164 = vld [vmem:[%s4] sm:$0x1]
    %v166 = vlaneseq
    %v167 = vshrl.u32 %v166, 7
    %v168 = vsub.s32 0, %v167
    %v169 = vrot.slane %v164, %v168
    %v187 = vunpack.c.l.b16 %v148
    %v188 = vunpack.c.l.b16 %v149
    %v189 = vunpack.c.l.b16 %v150
    %v190 = vunpack.c.l.b16 %v151
    %v191 = vunpack.c.l.b16 %v152
    %v192 = vunpack.c.l.b16 %v153
    %v193 = vunpack.c.l.b16 %v154
    %v194 = vunpack.c.l.b16 %v155
    %v195 = vunpack.c.l.b16 %v156
    %v196 = vunpack.c.l.b16 %v157
    %v197 = vunpack.c.l.b16 %v158
    %v198 = vunpack.c.l.b16 %v159
    %v199 = vunpack.c.l.b16 %v160
    %v200 = vunpack.c.l.b16 %v161
    %v201 = vunpack.c.l.b16 %v162
    %v202 = vunpack.c.l.b16 %v163
    %v203 = vpack.c.b16 %v188, %v187
    %v204 = vpack.c.b16 %v190, %v189
    %v205 = vpack.c.b16 %v192, %v191
    %v206 = vpack.c.b16 %v194, %v193
    %v207 = vpack.c.b16 %v196, %v195
    %v208 = vpack.c.b16 %v198, %v197
    %v209 = vpack.c.b16 %v200, %v199
    %v210 = vpack.c.b16 %v202, %v201
    %219 = vmatprep.subr.bf16.mxu0 0
    %220 = vmatpush1.bf16.msra.mxu0 %v203
    %221 = vmatprep.subr.bf16.mxu0 0
    %222 = vmatpush1.bf16.msra.mxu0 %v204
    %223 = vmatprep.subr.bf16.mxu0 0
    %224 = vmatpush1.bf16.msra.mxu0 %v205
    %225 = vmatprep.subr.bf16.mxu0 0
    %226 = vmatpush1.bf16.msra.mxu0 %v206
    %227 = vmatprep.subr.bf16.mxu0 0
    %228 = vmatpush1.bf16.msra.mxu0 %v207
    %229 = vmatprep.subr.bf16.mxu0 0
    %230 = vmatpush1.bf16.msra.mxu0 %v208
    %231 = vmatprep.subr.bf16.mxu0 0
    %232 = vmatpush1.bf16.msra.mxu0 %v209
    %233 = vmatprep.subr.bf16.mxu0 0
    %234 = vmatpush1.bf16.msra.mxu0 %v210
    %235 = vmatprep.subr.bf16.mxu0 0
    %236 = vmatpush1.bf16.msra.mxu0 0
    %237 = vmatprep.subr.bf16.mxu0 0
    %238 = vmatpush1.bf16.msra.mxu0 0
    %239 = vmatprep.subr.bf16.mxu0 0
    %240 = vmatpush1.bf16.msra.mxu0 0
    %241 = vmatprep.subr.bf16.mxu0 0
    %242 = vmatpush1.bf16.msra.mxu0 0
    %243 = vmatprep.subr.bf16.mxu0 0
    %244 = vmatpush1.bf16.msra.mxu0 0
    %245 = vmatprep.subr.bf16.mxu0 0
    %246 = vmatpush1.bf16.msra.mxu0 0
    %247 = vmatprep.subr.bf16.mxu0 0
    %248 = vmatpush1.bf16.msra.mxu0 0
    %249 = vmatprep.subr.bf16.mxu0 0
    %250 = vmatpush1.bf16.msra.mxu0 0
    %251 = vmatprep.mubr.bf16.mxu0 0
    %252 = vmatmul.mubr.bf16.gmra.mrb[0].mxu0 %v147
    %v253 = vpop.f32.mrb[0].mxu0
    %v254 = vadd.f32 %v169, %v253
    %v255 = vpop.f32.mrb[0].mxu0
    %v256 = vpop.f32.mrb[0].mxu0
    %v257 = vpop.f32.mrb[0].mxu0
    %258 = vdwg.mxu0
    %v259 = vmax.f32 %v254, 0.0
    %v260 = vpack.c.bf16 %v259, %v259
    %s261 = scalar_lea.vmem [#allocation8], 64
    %v262 = vld [vmem:[%s261] sm:$0xf]
    %v263 = vld [vmem:[%s261 + $0x4] sm:$0xf]
    %v264 = vld [vmem:[%s261 + $0x8] sm:$0xf]
    %v265 = vld [vmem:[%s261 + $0xc] sm:$0xf]
    %v266 = vld [vmem:[%s261 + $0x10] sm:$0xf]
    %v267 = vld [vmem:[%s261 + $0x14] sm:$0xf]
    %v268 = vld [vmem:[%s261 + $0x18] sm:$0xf]
    %v269 = vld [vmem:[%s261 + $0x1c] sm:$0xf]
    %v270 = vld [vmem:[%s261 + $0x20] sm:$0xf]
    %v271 = vld [vmem:[%s261 + $0x24] sm:$0xf]
    %v272 = vld [vmem:[%s261 + $0x28] sm:$0xf]
    %v273 = vld [vmem:[%s261 + $0x2c] sm:$0xf]
    %v274 = vld [vmem:[%s261 + $0x30] sm:$0xf]
    %v275 = vld [vmem:[%s261 + $0x34] sm:$0xf]
    %v276 = vld [vmem:[%s261 + $0x38] sm:$0xf]
    %v277 = vld [vmem:[%s261 + $0x3c] sm:$0xf]
    %s278 = scalar_lea.vmem %s4, 1
    %v279 = vld [vmem:[%s278] sm:$0x1]
    %v281 = vlaneseq
    %v282 = vshrl.u32 %v281, 7
    %v283 = vsub.s32 0, %v282
    %v284 = vrot.slane %v279, %v283
    %v302 = vunpack.c.l.b16 %v262
    %v303 = vunpack.c.l.b16 %v263
    %v304 = vunpack.c.l.b16 %v264
    %v305 = vunpack.c.l.b16 %v265
    %v306 = vunpack.c.l.b16 %v266
    %v307 = vunpack.c.l.b16 %v267
    %v308 = vunpack.c.l.b16 %v268
    %v309 = vunpack.c.l.b16 %v269
    %v310 = vunpack.c.l.b16 %v270
    %v311 = vunpack.c.l.b16 %v271
    %v312 = vunpack.c.l.b16 %v272
    %v313 = vunpack.c.l.b16 %v273
    %v314 = vunpack.c.l.b16 %v274
    %v315 = vunpack.c.l.b16 %v275
    %v316 = vunpack.c.l.b16 %v276
    %v317 = vunpack.c.l.b16 %v277
    %v318 = vpack.c.b16 %v303, %v302
    %v319 = vpack.c.b16 %v305, %v304
    %v320 = vpack.c.b16 %v307, %v306
    %v321 = vpack.c.b16 %v309, %v308
    %v322 = vpack.c.b16 %v311, %v310
    %v323 = vpack.c.b16 %v313, %v312
    %v324 = vpack.c.b16 %v315, %v314
    %v325 = vpack.c.b16 %v317, %v316
    %334 = vmatprep.subr.bf16.mxu0 0
    %335 = vmatpush1.bf16.msra.mxu0 %v318
    %336 = vmatprep.subr.bf16.mxu0 0
    %337 = vmatpush1.bf16.msra.mxu0 %v319
    %338 = vmatprep.subr.bf16.mxu0 0
    %339 = vmatpush1.bf16.msra.mxu0 %v320
    %340 = vmatprep.subr.bf16.mxu0 0
    %341 = vmatpush1.bf16.msra.mxu0 %v321
    %342 = vmatprep.subr.bf16.mxu0 0
    %343 = vmatpush1.bf16.msra.mxu0 %v322
    %344 = vmatprep.subr.bf16.mxu0 0
    %345 = vmatpush1.bf16.msra.mxu0 %v323
    %346 = vmatprep.subr.bf16.mxu0 0
    %347 = vmatpush1.bf16.msra.mxu0 %v324
    %348 = vmatprep.subr.bf16.mxu0 0
    %349 = vmatpush1.bf16.msra.mxu0 %v325
    %350 = vmatprep.subr.bf16.mxu0 0
    %351 = vmatpush1.bf16.msra.mxu0 0
    %352 = vmatprep.subr.bf16.mxu0 0
    %353 = vmatpush1.bf16.msra.mxu0 0
    %354 = vmatprep.subr.bf16.mxu0 0
    %355 = vmatpush1.bf16.msra.mxu0 0
    %356 = vmatprep.subr.bf16.mxu0 0
    %357 = vmatpush1.bf16.msra.mxu0 0
    %358 = vmatprep.subr.bf16.mxu0 0
    %359 = vmatpush1.bf16.msra.mxu0 0
    %360 = vmatprep.subr.bf16.mxu0 0
    %361 = vmatpush1.bf16.msra.mxu0 0
    %362 = vmatprep.subr.bf16.mxu0 0
    %363 = vmatpush1.bf16.msra.mxu0 0
    %364 = vmatprep.subr.bf16.mxu0 0
    %365 = vmatpush1.bf16.msra.mxu0 0
    %366 = vmatprep.mubr.bf16.mxu0 0
    %367 = vmatmul.mubr.bf16.gmra.mrb[0].mxu0 %v260
    %v368 = vpop.f32.mrb[0].mxu0
    %v369 = vadd.f32 %v284, %v368
    %v370 = vpop.f32.mrb[0].mxu0
    %v371 = vpop.f32.mrb[0].mxu0
    %v372 = vpop.f32.mrb[0].mxu0
    %373 = vdwg.mxu0
    %v374 = vmax.f32 %v369, 0.0
    %v375 = vpack.c.bf16 %v374, %v374
    %v376 = vld [vmem:[#allocation9] sm:$0xf]
    %v377 = vld [vmem:[#allocation9 + $0x4] sm:$0xf]
    %v378 = vld [vmem:[#allocation9 + $0x8] sm:$0xf]
    %v379 = vld [vmem:[#allocation9 + $0xc] sm:$0xf]
    %v380 = vld [vmem:[#allocation9 + $0x10] sm:$0xf]
    %v381 = vld [vmem:[#allocation9 + $0x14] sm:$0xf]
    %v382 = vld [vmem:[#allocation9 + $0x18] sm:$0xf]
    %v383 = vld [vmem:[#allocation9 + $0x1c] sm:$0xf]
    %v384 = vld [vmem:[#allocation9 + $0x20] sm:$0xf]
    %v385 = vld [vmem:[#allocation9 + $0x24] sm:$0xf]
    %v386 = vld [vmem:[#allocation9 + $0x28] sm:$0xf]
    %v387 = vld [vmem:[#allocation9 + $0x2c] sm:$0xf]
    %v388 = vld [vmem:[#allocation9 + $0x30] sm:$0xf]
    %v389 = vld [vmem:[#allocation9 + $0x34] sm:$0xf]
    %v390 = vld [vmem:[#allocation9 + $0x38] sm:$0xf]
    %v391 = vld [vmem:[#allocation9 + $0x3c] sm:$0xf]
    %v408 = vunpack.c.l.b16 %v376
    %v409 = vunpack.c.l.b16 %v377
    %v410 = vunpack.c.l.b16 %v378
    %v411 = vunpack.c.l.b16 %v379
    %v412 = vunpack.c.l.b16 %v380
    %v413 = vunpack.c.l.b16 %v381
    %v414 = vunpack.c.l.b16 %v382
    %v415 = vunpack.c.l.b16 %v383
    %v416 = vunpack.c.l.b16 %v384
    %v417 = vunpack.c.l.b16 %v385
    %v418 = vunpack.c.l.b16 %v386
    %v419 = vunpack.c.l.b16 %v387
    %v420 = vunpack.c.l.b16 %v388
    %v421 = vunpack.c.l.b16 %v389
    %v422 = vunpack.c.l.b16 %v390
    %v423 = vunpack.c.l.b16 %v391
    %v424 = vpack.c.b16 %v409, %v408
    %v425 = vpack.c.b16 %v411, %v410
    %v426 = vpack.c.b16 %v413, %v412
    %v427 = vpack.c.b16 %v415, %v414
    %v428 = vpack.c.b16 %v417, %v416
    %v429 = vpack.c.b16 %v419, %v418
    %v430 = vpack.c.b16 %v421, %v420
    %v431 = vpack.c.b16 %v423, %v422
    %440 = vmatprep.subr.bf16.mxu0 0
    %441 = vmatpush1.bf16.msra.mxu0 %v424
    %442 = vmatprep.subr.bf16.mxu0 0
    %443 = vmatpush1.bf16.msra.mxu0 %v425
    %444 = vmatprep.subr.bf16.mxu0 0
    %445 = vmatpush1.bf16.msra.mxu0 %v426
    %446 = vmatprep.subr.bf16.mxu0 0
    %447 = vmatpush1.bf16.msra.mxu0 %v427
    %448 = vmatprep.subr.bf16.mxu0 0
    %449 = vmatpush1.bf16.msra.mxu0 %v428
    %450 = vmatprep.subr.bf16.mxu0 0
    %451 = vmatpush1.bf16.msra.mxu0 %v429
    %452 = vmatprep.subr.bf16.mxu0 0
    %453 = vmatpush1.bf16.msra.mxu0 %v430
    %454 = vmatprep.subr.bf16.mxu0 0
    %455 = vmatpush1.bf16.msra.mxu0 %v431
    %456 = vmatprep.subr.bf16.mxu0 0
    %457 = vmatpush1.bf16.msra.mxu0 0
    %458 = vmatprep.subr.bf16.mxu0 0
    %459 = vmatpush1.bf16.msra.mxu0 0
    %460 = vmatprep.subr.bf16.mxu0 0
    %461 = vmatpush1.bf16.msra.mxu0 0
    %462 = vmatprep.subr.bf16.mxu0 0
    %463 = vmatpush1.bf16.msra.mxu0 0
    %464 = vmatprep.subr.bf16.mxu0 0
    %465 = vmatpush1.bf16.msra.mxu0 0
    %466 = vmatprep.subr.bf16.mxu0 0
    %467 = vmatpush1.bf16.msra.mxu0 0
    %468 = vmatprep.subr.bf16.mxu0 0
    %469 = vmatpush1.bf16.msra.mxu0 0
    %470 = vmatprep.subr.bf16.mxu0 0
    %471 = vmatpush1.bf16.msra.mxu0 0
    %472 = vmatprep.mubr.bf16.mxu0 0
    %473 = vmatmul.mubr.bf16.gmra.mrb[0].mxu0 %v375
    %v474 = vpop.f32.mrb[0].mxu0
    %v475 = vadd.f32 0.0, %v474
    %v476 = vpop.f32.mrb[0].mxu0
    %v477 = vpop.f32.mrb[0].mxu0
    %v478 = vpop.f32.mrb[0].mxu0
    %479 = vdwg.mxu0
    %480 = vxpose.xlu0.b32.start [1/16] %v475, 128
    %481 = vxpose.xlu0.b32.cont [2/16] 0.0, 128
    %482 = vxpose.xlu0.b32.cont [3/16] 0.0, 128
    %483 = vxpose.xlu0.b32.cont [4/16] 0.0, 128
    %484 = vxpose.xlu0.b32.cont [5/16] 0.0, 128
    %485 = vxpose.xlu0.b32.cont [6/16] 0.0, 128
    %486 = vxpose.xlu0.b32.cont [7/16] 0.0, 128
    %487 = vxpose.xlu0.b32.cont [8/16] 0.0, 128
    %488 = vxpose.xlu0.b32.cont [9/16] 0.0, 128
    %489 = vxpose.xlu0.b32.cont [10/16] 0.0, 128
    %490 = vxpose.xlu0.b32.cont [11/16] 0.0, 128
    %491 = vxpose.xlu0.b32.cont [12/16] 0.0, 128
    %492 = vxpose.xlu0.b32.cont [13/16] 0.0, 128
    %493 = vxpose.xlu0.b32.cont [14/16] 0.0, 128
    %494 = vxpose.xlu0.b32.cont [15/16] 0.0, 128
    %495 = vxpose.xlu0.b32.end [16/16] 0.0, 128
    %v496 = vpop.trf.xlu0
    %v497 = vpop.trf.xlu0
    %v498 = vpop.trf.xlu0
    %v499 = vpop.trf.xlu0
    %v500 = vpop.trf.xlu0
    %v501 = vpop.trf.xlu0
    %v502 = vpop.trf.xlu0
    %v503 = vpop.trf.xlu0
    %v504 = vpop.trf.xlu0
    %v505 = vpop.trf.xlu0
    %v506 = vpop.trf.xlu0
    %v507 = vpop.trf.xlu0
    %v508 = vpop.trf.xlu0
    %v509 = vpop.trf.xlu0
    %v510 = vpop.trf.xlu0
    %v511 = vpop.trf.xlu0
    %v512 = vld [vmem:[#allocation2] sm:$0x1]
    %514 = vset.pattern.permute.xlu0 0
    %515 = vperm.xlu0 %514, %v512
    %v516 = vpop.permute.xlu0 %515
    %v518 = vlaneseq
    %v519 = vshrl.u32 %v518, 7
    %v520 = vsub.s32 0, %v519
    %v521 = vrot.slane %v516, %v520
    %v522 = vadd.f32 %v496, %v521
    %vm523 = vcmask 57344
    %524 = vst.msk [vmem:[#allocation11] sm:$0x1] %vm523, %v522
    // Predicated region
    $region46: #{tpu_custom_call.1} parent=1 // pred_check
      _
    $region47: #{tpu_custom_call.1} parent=1 // pred_check_branch
      %526 = sbr.rel (0) target = $region49
    $region48: #{tpu_custom_call.1} parent=1 // pred_region
      %s528 = ssub.s32 16, 16
      %529 = vsyncadd [#allocation5], %s528
      %s531 = sshll.u32 [#allocation11], 4
      %s532 = int_to_ptr.vmem [resolvable:$true] %s531
      %534 = dma.vmem_to_hbm [thread:$0]  %s532, 16, %s7, [#allocation5]
    $region49: #{tpu_custom_call.1} parent=1 // pred_fallthru
      _
    // Predicated region
    $region50: #{tpu_custom_call.1} parent=1 // pred_check
      _
    $region51: #{tpu_custom_call.1} parent=1 // pred_check_branch
      %536 = sbr.rel (0) target = $region53
    $region52: #{tpu_custom_call.1} parent=1 // pred_region
      %537 = dma.done [#allocation5], 16
    $region53: #{tpu_custom_call.1} parent=1 // pred_fallthru
      _
    %538 = vsyncpa [#allocation4], 1
    %539 = vsyncpa [#allocation7], 1
    %540 = vsyncpa [#allocation10], 1
    %541 = vsyncpa [#allocation5], 1

</llo_original>
